<compile_context>
chip_gen: v5e
topology: v5e:2x2
jax: 0.10.0
libtpu: 0.0.40
codegen_flags: <defaults>
</compile_context>

<pallas_src>
import functools

import jax
import jax.numpy as jnp
from jax.experimental import pallas as pl
from jax.experimental.pallas import tpu as pltpu


def _round_hidden(hidden_dim, multiple_of, ffn_dim_multiplier):
    """Reproduce the hidden_dim computation from FeedForward.__init__."""
    hidden_dim = int(2 * hidden_dim / 3)
    if ffn_dim_multiplier is not None:
        hidden_dim = int(ffn_dim_multiplier * hidden_dim)
    return multiple_of * ((hidden_dim + multiple_of - 1) // multiple_of)


# --------------------------------------------------------------------------- #
# Kernels
# --------------------------------------------------------------------------- #
def _ffn_chunk(x_ref, w1t_ref, w3t_ref, b3_ref, w2t_ref):
    """f32 (tm, D) contribution of one hidden-dim chunk."""
    cdt = w1t_ref.dtype
    x = x_ref[...].astype(cdt)                                  # cast after block DMA
    h1 = jnp.dot(x, w1t_ref[...], preferred_element_type=jnp.float32)
    h3 = jnp.dot(x, w3t_ref[...], preferred_element_type=jnp.float32)
    h3 = h3 + b3_ref[...]                                       # (1, tn_h) f32 broadcast
    gated = (h1 * jax.nn.sigmoid(h1)) * h3                      # SiLU(w1 x) * (w3 x + b3)
    return jnp.dot(gated.astype(cdt), w2t_ref[...],
                   preferred_element_type=jnp.float32)


def ffn_kernel_out_acc(x_ref, w1t_ref, w3t_ref, b3_ref, w2t_ref, o_ref):
    """f32 output: accumulate directly into the resident output block."""
    k = pl.program_id(1)

    @pl.when(k == 0)
    def _init():
        o_ref[...] = jnp.zeros_like(o_ref)

    o_ref[...] += _ffn_chunk(x_ref, w1t_ref, w3t_ref, b3_ref, w2t_ref)


def ffn_kernel_scratch_acc(x_ref, w1t_ref, w3t_ref, b3_ref, w2t_ref, o_ref, acc_ref):
    """Non-f32 output: accumulate in f32 scratch, cast once at the last step."""
    k = pl.program_id(1)

    @pl.when(k == 0)
    def _init():
        acc_ref[...] = jnp.zeros_like(acc_ref)

    acc_ref[...] += _ffn_chunk(x_ref, w1t_ref, w3t_ref, b3_ref, w2t_ref)

    @pl.when(k == pl.num_programs(1) - 1)
    def _finalize():
        o_ref[...] = acc_ref[...].astype(o_ref.dtype)


# --------------------------------------------------------------------------- #
# Weight preparation (once, outside the per-call path)
# --------------------------------------------------------------------------- #
def prepare_weights(w1, w2, w3, b3, compute_dtype=jnp.bfloat16,
                    hidden_pad_multiple=512):
    """Transpose PyTorch-layout weights once, zero-pad the hidden dim to a
    tiling-friendly multiple and cast to the MXU compute dtype (bias stays f32).
    Zero-padded hidden columns contribute exactly 0 (their w2 rows are zero)."""
    w1t = jnp.asarray(w1, jnp.float32).T                 # (D, H)
    w3t = jnp.asarray(w3, jnp.float32).T                 # (D, H)
    w2t = jnp.asarray(w2, jnp.float32).T                 # (H, D)
    b3r = jnp.asarray(b3, jnp.float32).reshape(1, -1)    # (1, H)
    H = w1t.shape[1]
    H_pad = hidden_pad_multiple * (-(-H // hidden_pad_multiple))
    if H_pad != H:
        pad = H_pad - H
        w1t = jnp.pad(w1t, ((0, 0), (0, pad)))
        w3t = jnp.pad(w3t, ((0, 0), (0, pad)))
        b3r = jnp.pad(b3r, ((0, 0), (0, pad)))
        w2t = jnp.pad(w2t, ((0, pad), (0, 0)))
    return (w1t.astype(compute_dtype), w3t.astype(compute_dtype),
            w2t.astype(compute_dtype), b3r)


# --------------------------------------------------------------------------- #
# Tile / VMEM-budget selection
# --------------------------------------------------------------------------- #
def _pick_tile(total, desired, align):
    """Largest tile <= desired that is a multiple of `align` and divides
    `total`; falls back to the full extent for tiny / awkward dims."""
    t = min(desired, total)
    t = max(align, (t // align) * align)
    while total % t != 0 and t > align:
        t -= align
    return t if total % t == 0 else total


_V7X_VMEM_BYTES = 64 * 1024 * 1024


def _vmem_capacity_bytes():
    try:
        cap = getattr(pltpu.get_tpu_info(), "vmem_capacity_bytes", None)
        if cap:
            return int(cap)
    except Exception:
        pass
    return _V7X_VMEM_BYTES   # conservative default: smallest per-core VMEM (v7x)


# --------------------------------------------------------------------------- #
# Wrapper
# --------------------------------------------------------------------------- #
@functools.partial(jax.jit, static_argnames=("tm", "tn_h", "weight_buffers"))
def feed_forward(x, w1t, w3t, w2t, b3, *, tm=None, tn_h=None, weight_buffers=2):
    """x: [B, S, D].  w1t/w3t: [D, H], w2t: [H, D], b3: [1, H] from
    prepare_weights.  tm / tn_h default to a VMEM-budget-derived, chip-aware
    choice; pass explicit values to override."""
    B, S, D = x.shape
    H = w1t.shape[1]
    M = B * S

    out_dtype = x.dtype
    x_bytes = jnp.dtype(x.dtype).itemsize
    out_bytes = jnp.dtype(out_dtype).itemsize
    w_bytes = jnp.dtype(w1t.dtype).itemsize

    vmem_cap = _vmem_capacity_bytes()
    # Scoped VMEM limit: ~7/8 of physical, capped at 96 MiB on 128 MiB chips.
    vmem_limit = min(vmem_cap * 7 // 8, 96 * 1024 * 1024)

    # ---- token tile: arithmetic intensity = tm FLOPs per weight byte -------
    if tm is None:
        # >= 512 clears the MXU/HBM crossover on v7x (~311 FLOP/B) and v5e
        # (~240); 1024 clears v6e (~570).  Big-VMEM chips take the larger tile.
        tm = 1024 if vmem_cap >= 128 * 1024 * 1024 else 512
    # Keep >= 2 token blocks when M allows so the "parallel" axis shards
    # across both TensorCores on v7x (harmless on single-TC chips).
    if M >= 512 and tm > M // 2:
        tm = M // 2
    tm = _pick_tile(M, tm, 8)

    # ---- hidden-dim chunk: sized from the remaining VMEM budget ------------
    h_align = 256 if H % 256 == 0 else 128     # full MXU width on v6e/v7x
    if tn_h is None:
        io_bytes = 2 * tm * D * x_bytes + 2 * tm * D * 4 + tm * D * 4
        slack = 2 * 1024 * 1024
        weight_budget = max(vmem_limit - io_bytes - slack,
                            weight_buffers * 3 * D * h_align * w_bytes)
        tn_h = weight_budget // (weight_buffers * 3 * D * w_bytes)
        tn_h = max(h_align, (tn_h // h_align) * h_align)
    tn_h = _pick_tile(H, tn_h, h_align)

    assert M % tm == 0 and H % tn_h == 0, (M, tm, H, tn_h)

    # Fail loudly instead of OOM-ing the compiler if the tiles cannot fit.
    est = (2 * tm * D * x_bytes                        # x, double-buffered
           + 2 * tm * D * out_bytes + tm * D * 4       # out (+ possible f32 scratch)
           + weight_buffers * 3 * D * tn_h * w_bytes   # w1t/w3t/w2t chunks
           + weight_buffers * tn_h * 4)                # b3 chunks
    if est > vmem_cap:
        raise ValueError(
            f"tile choice (tm={tm}, tn_h={tn_h}) needs ~{est >> 20} MiB VMEM "
            f"> {vmem_cap >> 20} MiB physical; pad H / lower tm")
    vmem_limit = max(vmem_limit, min(vmem_cap, est + 2 * 1024 * 1024))

    x2 = x.reshape(M, D)                 # NO dtype cast here: cast in-kernel
    grid = (M // tm, H // tn_h)          # M parallel (megacore), H reduction last

    if weight_buffers != 2:
        # Deeper weight pipelining (e.g. 3 on v5e/v6e) hides the DMA burst at
        # token-tile transitions; keep depth 2 on v7x where VMEM is tight.
        def wspec(shape, imap):
            return pl.BlockSpec(shape, imap, pipeline_mode=pl.Buffered(weight_buffers))
    else:
        wspec = pl.BlockSpec

    in_specs = [
        pl.BlockSpec((tm, D), lambda i, k: (i, 0)),    # x tile (resident over k)
        wspec((D, tn_h), lambda i, k: (0, k)),         # w1^T chunk
        wspec((D, tn_h), lambda i, k: (0, k)),         # w3^T chunk
        wspec((1, tn_h), lambda i, k: (0, k)),         # b3 chunk (f32)
        wspec((tn_h, D), lambda i, k: (k, 0)),         # w2^T chunk
    ]
    out_spec = pl.BlockSpec((tm, D), lambda i, k: (i, 0))

    if out_dtype == jnp.float32:
        kernel = ffn_kernel_out_acc        # accumulate directly in o_ref
        scratch_shapes = []
    else:
        kernel = ffn_kernel_scratch_acc    # f32 scratch, cast once at the end
        scratch_shapes = [pltpu.VMEM((tm, D), jnp.float32)]

    out = pl.pallas_call(
        kernel,
        out_shape=jax.ShapeDtypeStruct((M, D), out_dtype),
        grid_spec=pltpu.PrefetchScalarGridSpec(
            num_scalar_prefetch=0,
            grid=grid,
            in_specs=in_specs,
            out_specs=out_spec,
            scratch_shapes=scratch_shapes,
        ),
        compiler_params=pltpu.CompilerParams(
            dimension_semantics=("parallel", "arbitrary"),
            vmem_limit_bytes=int(vmem_limit),
        ),
    )(x2, w1t, w3t, b3, w2t)
    return out.reshape(B, S, D)


# --------------------------------------------------------------------------- #
# References
# --------------------------------------------------------------------------- #
def feed_forward_ref_f32(x, w1, w2, w3, b3):
    """Pure-f32 JAX reference mirroring the PyTorch forward."""
    h1 = x @ w1.T
    h3 = x @ w3.T + b3
    return (jax.nn.silu(h1) * h3) @ w2.T


def feed_forward_ref_bf16(x, w1, w2, w3, b3):
    """Reference mirroring the kernel's bf16-in / f32-accumulate numerics."""
    bf = jnp.bfloat16
    xb = x.astype(bf)
    h1 = jnp.dot(xb, w1.T.astype(bf), preferred_element_type=jnp.float32)
    h3 = jnp.dot(xb, w3.T.astype(bf), preferred_element_type=jnp.float32) + b3
    g = (h1 * jax.nn.sigmoid(h1)) * h3
    return jnp.dot(g.astype(bf), w2.T.astype(bf), preferred_element_type=jnp.float32)


if __name__ == "__main__":
    # Small (but lane-dense) LLaMA2-style config: dim=128, hidden rounds to 384.
    dim = 128
    multiple_of = 128
    hidden = _round_hidden(4 * dim, multiple_of, None)   # -> 384 (padded to 512)

    B, S = 2, 64          # M = 128 tokens
    key = jax.random.PRNGKey(0)
    kx, k1, k2, k3, kb = jax.random.split(key, 5)

    x = jax.random.normal(kx, (B, S, dim), dtype=jnp.float32)
    # Parameters in PyTorch nn.Linear layout [out_features, in_features].
    w1 = jax.random.normal(k1, (hidden, dim), dtype=jnp.float32) * 0.05
    w2 = jax.random.normal(k2, (dim, hidden), dtype=jnp.float32) * 0.05
    w3 = jax.random.normal(k3, (hidden, dim), dtype=jnp.float32) * 0.05
    b3 = jax.random.normal(kb, (hidden,), dtype=jnp.float32) * 0.05

    # Transpose + pad + cast weights once, outside the per-call path.
    w1t, w3t, w2t, b3r = prepare_weights(w1, w2, w3, b3)   # hidden 384 -> 512

    ref_f32 = feed_forward_ref_f32(x, w1, w2, w3, b3)
    ref_bf16 = feed_forward_ref_bf16(x, w1, w2, w3, b3)

    # 1) Explicit small tiles: grid (128/64, 512/256) = (2, 2) — exercises both
    #    the parallel token axis and the hidden-dim reduction/accumulation path.
    out = feed_forward(x, w1t, w3t, w2t, b3r, tm=64, tn_h=256)
    jax.block_until_ready(out)
    assert out.shape == (B, S, dim)
    err_bf = jnp.max(jnp.abs(out - ref_bf16))
    assert jnp.allclose(out, ref_bf16, atol=1e-4, rtol=1e-3), f"bf16-ref max err {err_bf}"
    err_f32 = jnp.max(jnp.abs(out - ref_f32))
    assert jnp.allclose(out, ref_f32, atol=3e-2, rtol=3e-2), f"f32-ref max err {err_f32}"

    # 2) Auto (VMEM-budget / chip-derived) tiles.
    out_auto = feed_forward(x, w1t, w3t, w2t, b3r)
    jax.block_until_ready(out_auto)
    assert jnp.allclose(out_auto, ref_bf16, atol=1e-4, rtol=1e-3)

    # 3) bf16 activations / bf16 output (scratch-accumulator kernel path).
    out_bf16 = feed_forward(x.astype(jnp.bfloat16), w1t, w3t, w2t, b3r,
                            tm=64, tn_h=256)
    jax.block_until_ready(out_bf16)
    assert out_bf16.dtype == jnp.bfloat16
    assert jnp.allclose(out_bf16.astype(jnp.float32), ref_bf16, atol=2e-2, rtol=2e-2)

    print("KERNEL_OK")
</pallas_src>

<mosaic_0001>
module attributes {stable_mosaic.version = 11 : i64} {
  func.func @ffn_kernel_out_acc(%arg0: i32, %arg1: i32, %arg2: memref<64x128xf32, #tpu.memory_space<vmem>>, %arg3: memref<128x256xbf16, #tpu.memory_space<vmem>>, %arg4: memref<128x256xbf16, #tpu.memory_space<vmem>>, %arg5: memref<1x256xf32, #tpu.memory_space<vmem>>, %arg6: memref<256x128xbf16, #tpu.memory_space<vmem>>, %arg7: memref<64x128xf32, #tpu.memory_space<vmem>>) attributes {dimension_semantics = [#tpu.dimension_semantics<parallel>, #tpu.dimension_semantics<arbitrary>], iteration_bounds = array<i64: 2, 2>, scalar_prefetch = 0 : i64, scratch_operands = 0 : i64, tpu.core_type = #tpu.core_type<tc>, window_params = [{transform_indices = @transform_0, window_bounds = array<i64: 64, 128>}, {transform_indices = @transform_1, window_bounds = array<i64: 128, 256>}, {transform_indices = @transform_2, window_bounds = array<i64: 128, 256>}, {transform_indices = @transform_3, window_bounds = array<i64: 1, 256>}, {transform_indices = @transform_4, window_bounds = array<i64: 256, 128>}, {transform_indices = @transform_5, window_bounds = array<i64: 64, 128>}]} {
    %c0_i32 = arith.constant 0 : i32
    %0 = arith.cmpi eq, %arg1, %c0_i32 : i32
    %1 = arith.extui %0 : i1 to i32
    %c0_i32_0 = arith.constant 0 : i32
    %2 = arith.cmpi ne, %1, %c0_i32_0 : i32
    scf.if %2 {
      %cst_17 = arith.constant 0.000000e+00 : f32
      %25 = vector.broadcast %cst_17 : f32 to vector<64x128xf32>
      %c0_18 = arith.constant 0 : index
      %c0_19 = arith.constant 0 : index
      %26 = vector.load %arg7[%c0_18, %c0_19] : memref<64x128xf32, #tpu.memory_space<vmem>>, vector<64x128xf32>
      tpu.vector_store %arg7[%c0_18, %c0_19], %25 {strides = array<i32>} : memref<64x128xf32, #tpu.memory_space<vmem>>, vector<64x128xf32>,
    } else {
    }
    %c0 = arith.constant 0 : index
    %c0_1 = arith.constant 0 : index
    %3 = vector.load %arg7[%c0, %c0_1] : memref<64x128xf32, #tpu.memory_space<vmem>>, vector<64x128xf32>
    %c0_2 = arith.constant 0 : index
    %c0_3 = arith.constant 0 : index
    %4 = vector.load %arg2[%c0_2, %c0_3] : memref<64x128xf32, #tpu.memory_space<vmem>>, vector<64x128xf32>
    %5 = arith.truncf %4 : vector<64x128xf32> to vector<64x128xbf16>
    %c0_4 = arith.constant 0 : index
    %c0_5 = arith.constant 0 : index
    %6 = vector.load %arg3[%c0_4, %c0_5] : memref<128x256xbf16, #tpu.memory_space<vmem>>, vector<128x256xbf16>
    %cst = arith.constant dense<0.000000e+00> : vector<64x256xf32>
    %7 = tpu.matmul %5, %6, %cst {dimension_numbers = #tpu.dot_dimension_numbers<[1], [0], [0], [1], [0, 0, 1, 1], [], []>} : vector<64x128xbf16>, vector<128x256xbf16>, vector<64x256xf32> -> vector<64x256xf32>
    %c0_6 = arith.constant 0 : index
    %c0_7 = arith.constant 0 : index
    %8 = vector.load %arg4[%c0_6, %c0_7] : memref<128x256xbf16, #tpu.memory_space<vmem>>, vector<128x256xbf16>
    %cst_8 = arith.constant dense<0.000000e+00> : vector<64x256xf32>
    %9 = tpu.matmul %5, %8, %cst_8 {dimension_numbers = #tpu.dot_dimension_numbers<[1], [0], [0], [1], [0, 0, 1, 1], [], []>} : vector<64x128xbf16>, vector<128x256xbf16>, vector<64x256xf32> -> vector<64x256xf32>
    %c0_9 = arith.constant 0 : index
    %c0_10 = arith.constant 0 : index
    %10 = vector.load %arg5[%c0_9, %c0_10] : memref<1x256xf32, #tpu.memory_space<vmem>>, vector<1x256xf32>
    %11 = vector.broadcast %10 : vector<1x256xf32> to vector<64x256xf32>
    %12 = arith.addf %9, %11 : vector<64x256xf32>
    %13 = arith.negf %7 : vector<64x256xf32>
    %14 = math.exp %13 : vector<64x256xf32>
    %cst_11 = arith.constant 1.000000e+00 : f32
    %15 = vector.broadcast %cst_11 : f32 to vector<64x256xf32>
    %16 = arith.addf %15, %14 : vector<64x256xf32>
    %17 = arith.divf %15, %16 : vector<64x256xf32>
    %18 = arith.mulf %7, %17 : vector<64x256xf32>
    %19 = arith.mulf %18, %12 : vector<64x256xf32>
    %20 = arith.truncf %19 : vector<64x256xf32> to vector<64x256xbf16>
    %c0_12 = arith.constant 0 : index
    %c0_13 = arith.constant 0 : index
    %21 = vector.load %arg6[%c0_12, %c0_13] : memref<256x128xbf16, #tpu.memory_space<vmem>>, vector<256x128xbf16>
    %cst_14 = arith.constant dense<0.000000e+00> : vector<64x128xf32>
    %22 = tpu.matmul %20, %21, %cst_14 {dimension_numbers = #tpu.dot_dimension_numbers<[1], [0], [0], [1], [0, 0, 1, 1], [], []>} : vector<64x256xbf16>, vector<256x128xbf16>, vector<64x128xf32> -> vector<64x128xf32>
    %23 = arith.addf %3, %22 : vector<64x128xf32>
    %c0_15 = arith.constant 0 : index
    %c0_16 = arith.constant 0 : index
    %24 = vector.load %arg7[%c0_15, %c0_16] : memref<64x128xf32, #tpu.memory_space<vmem>>, vector<64x128xf32>
    tpu.vector_store %arg7[%c0_15, %c0_16], %23 {strides = array<i32>} : memref<64x128xf32, #tpu.memory_space<vmem>>, vector<64x128xf32>,
    return
  }
  func.func @transform_0(%arg0: i32, %arg1: i32) -> (i32, i32) {
    %c0_i32 = arith.constant 0 : i32
    %c0_i32_0 = arith.constant 0 : i32
    return %arg0, %c0_i32 : i32, i32
  }
  func.func @transform_1(%arg0: i32, %arg1: i32) -> (i32, i32) {
    %c0_i32 = arith.constant 0 : i32
    %c0_i32_0 = arith.constant 0 : i32
    return %c0_i32, %arg1 : i32, i32
  }
  func.func @transform_2(%arg0: i32, %arg1: i32) -> (i32, i32) {
    %c0_i32 = arith.constant 0 : i32
    %c0_i32_0 = arith.constant 0 : i32
    return %c0_i32, %arg1 : i32, i32
  }
  func.func @transform_3(%arg0: i32, %arg1: i32) -> (i32, i32) {
    %c0_i32 = arith.constant 0 : i32
    %c0_i32_0 = arith.constant 0 : i32
    return %c0_i32, %arg1 : i32, i32
  }
  func.func @transform_4(%arg0: i32, %arg1: i32) -> (i32, i32) {
    %c0_i32 = arith.constant 0 : i32
    %c0_i32_0 = arith.constant 0 : i32
    return %arg1, %c0_i32 : i32, i32
  }
  func.func @transform_5(%arg0: i32, %arg1: i32) -> (i32, i32) {
    %c0_i32 = arith.constant 0 : i32
    %c0_i32_0 = arith.constant 0 : i32
    return %arg0, %c0_i32 : i32, i32
  }
}

</mosaic_0001>

<llo_original>
// kernel: feed_forward.1
$region0: #{feed_forward.1}
  #allocation0 [shape = 'u32[]', space=smem, size = 0x4, offset = 0x4, fixed_abs, tag = 'smem constant byte address 0x4 - core index']
  #allocation1 [shape = 'u32[72,128]{1,0:T(1,128)}', space=vmem, size = 0x9000, scoped, tag = 'internal scratch']
  %s0 = inlined_call_operand.hbm [shape: f32[128,128], index: 0, kind: input, shape index: {}]
  %s1 = inlined_call_operand.hbm [shape: bf16[128,512], index: 1, kind: input, shape index: {}]
  %s2 = inlined_call_operand.hbm [shape: bf16[128,512], index: 2, kind: input, shape index: {}]
  %s3 = inlined_call_operand.vmem [shape: f32[1,512], index: 3, kind: input, shape index: {}]
  %s4 = inlined_call_operand.hbm [shape: bf16[512,128], index: 4, kind: input, shape index: {}]
  %s5 = inlined_call_operand.hbm [shape: f32[128,128], index: 5, kind: output, shape index: {}]
  %s6 = sld [smem:[#allocation0]]
  $region73: #{feed_forward.1} parent=0
    _
  %s8 = ssub.s32 1, %s6
  %s9 = scalar_select 0, %s8, %s6
  $region1: #{feed_forward.1} parent=0
    #allocation2 [shape = 'u8[65536]{0}', space=vmem, size = 0x10000, scoped, tag = 'input window, operand 0']
    #allocation3 [shape = 's32[2]{0}', space=sflag, size = 0x8, scoped, tag = 'scoped memory for feed_forward.1']
    #allocation4 [shape = 's32[2]{0}', space=sflag, size = 0x8, scoped, tag = 'scoped memory for feed_forward.1']
    #allocation5 [shape = 'u8[131072]{0}', space=vmem, size = 0x20000, scoped, tag = 'input window, operand 1']
    #allocation6 [shape = 's32[2]{0}', space=sflag, size = 0x8, scoped, tag = 'scoped memory for feed_forward.1']
    #allocation7 [shape = 'u8[131072]{0}', space=vmem, size = 0x20000, scoped, tag = 'input window, operand 2']
    #allocation8 [shape = 'u8[131072]{0}', space=vmem, size = 0x20000, scoped, tag = 'input window, operand 4']
    #allocation9 [shape = 's32[2]{0}', space=sflag, size = 0x8, scoped, tag = 'scoped memory for feed_forward.1']
    #allocation10 [shape = 'u8[65536]{0}', space=vmem, size = 0x10000, scoped, tag = 'output window, operand 0']
    %10 = vsyncpa [#allocation3], 0
    %s11 = scalar_lea.sflag [#allocation3], 1
    %12 = vsyncpa %s11, 0
    %13 = vsyncpa [#allocation6], 0
    %s14 = scalar_lea.sflag [#allocation6], 1
    %15 = vsyncpa %s14, 0
    %16 = vsyncpa [#allocation9], 0
    %s17 = scalar_lea.sflag [#allocation9], 1
    %18 = vsyncpa %s17, 0
    %19 = vsyncpa [#allocation4], 0
    %s20 = scalar_lea.sflag [#allocation4], 1
    %21 = vsyncpa %s20, 0
    loop: start=0, step=1, limit=6
    $region2: #{feed_forward.1} parent=1 // loop_pre_header
      _
    $region3: #{feed_forward.1} parent=1 // loop_header
      %s23 = sphi 0, %s27
      %p24 = scmp.ge.s32.totalorder %s23, 6
      %s30 = sphi 0, %s42
      %s31 = sphi 0, %s38
      %s32 = sphi 0, %s30
      %s33 = sphi 0, %s31
      %s34 = sphi 0, %s32
      %s35 = sphi 0, %s33
      %s45 = sphi 0, %s47
      %s48 = sphi 0, %s45
      %s49 = sphi 0, %s48
      %s65 = sphi 0, %s49
      %s71 = sphi 0, %s73
      %s74 = sphi 0, %s71
      %s75 = sphi 0, %s74
      %s91 = sphi 0, %s75
      %s97 = sphi 0, %s99
      %s100 = sphi 0, %s97
      %s101 = sphi 0, %s100
      %s117 = sphi 0, %s101
      %s123 = sphi 0, %s125
      %s126 = sphi 0, %s123
      %s127 = sphi 0, %s126
      %s143 = sphi 0, %s127
      %s149 = sphi 0, %s151
      %s152 = sphi 0, %s149
      %s153 = sphi 0, %s152
      %s169 = sphi 0, %s153
      %s175 = sphi 0, %s177
      %s178 = sphi 0, %s175
      %s179 = sphi 0, %s178
      %s195 = sphi 0, %s179
    $region4: #{feed_forward.1} parent=1 // loop_header_branch
      %26 = sbr.rel (%p24) target = $region8
    $region5: #{feed_forward.1} parent=1 // loop_body
      %s28 = ssub.s32 %s23, 1
      %s29 = ssub.s32 %s23, 2
      %s36 = sadd.s32 1, %s31
      %p37 = scmp.ge.s32.totalorder %s36, 2
      %s38 = scalar_select %p37, 0, %s36
      %s39 = sadd.s32 1, %s30
      %s40 = scalar_select %p37, %s39, %s30
      %p41 = scmp.ge.s32.totalorder %s40, 2
      %s42 = scalar_select %p41, 0, %s40
      %s43 = ssub.s32 %s30, %s42
      %p44 = scmp.eq.s32.totalorder %s43, 0
      %s46 = sadd.s32 %s45, 1
      %s47 = scalar_select %p44, %s45, %s46
      %p50 = pneg %p44
      %p51 = scmp.eq.s32.totalorder %s23, 3
      %p52 = por %p50, %p51
      %p53 = scmp.ne.s32.totalorder %s45, %s48
      %p54 = scmp.eq.s32.totalorder %s23, 0
      %p55 = por %p53, %p54
      %p56 = scmp.ne.s32.totalorder %s45, %s48
      %p57 = scmp.eq.s32.totalorder %s28, 3
      %p58 = por %p56, %p57
      %p59 = scmp.ne.s32.totalorder %s48, %s49
      %p60 = scmp.eq.s32.totalorder %s28, 0
      %p61 = por %p59, %p60
      %p62 = scmp.ne.s32.totalorder %s48, %s49
      %p63 = scmp.eq.s32.totalorder %s29, 3
      %p64 = por %p62, %p63
      %p66 = scmp.ne.s32.totalorder %s49, %s65
      %p67 = scmp.eq.s32.totalorder %s29, 0
      %p68 = por %p66, %p67
      %s69 = ssub.s32 %s31, %s38
      %p70 = scmp.eq.s32.totalorder %s69, 0
      %s72 = sadd.s32 %s71, 1
      %s73 = scalar_select %p70, %s71, %s72
      %p76 = pneg %p70
      %p77 = scmp.eq.s32.totalorder %s23, 3
      %p78 = por %p76, %p77
      %p79 = scmp.ne.s32.totalorder %s71, %s74
      %p80 = scmp.eq.s32.totalorder %s23, 0
      %p81 = por %p79, %p80
      %p82 = scmp.ne.s32.totalorder %s71, %s74
      %p83 = scmp.eq.s32.totalorder %s28, 3
      %p84 = por %p82, %p83
      %p85 = scmp.ne.s32.totalorder %s74, %s75
      %p86 = scmp.eq.s32.totalorder %s28, 0
      %p87 = por %p85, %p86
      %p88 = scmp.ne.s32.totalorder %s74, %s75
      %p89 = scmp.eq.s32.totalorder %s29, 3
      %p90 = por %p88, %p89
      %p92 = scmp.ne.s32.totalorder %s75, %s91
      %p93 = scmp.eq.s32.totalorder %s29, 0
      %p94 = por %p92, %p93
      %s95 = ssub.s32 %s31, %s38
      %p96 = scmp.eq.s32.totalorder %s95, 0
      %s98 = sadd.s32 %s97, 1
      %s99 = scalar_select %p96, %s97, %s98
      %p102 = pneg %p96
      %p103 = scmp.eq.s32.totalorder %s23, 3
      %p104 = por %p102, %p103
      %p105 = scmp.ne.s32.totalorder %s97, %s100
      %p106 = scmp.eq.s32.totalorder %s23, 0
      %p107 = por %p105, %p106
      %p108 = scmp.ne.s32.totalorder %s97, %s100
      %p109 = scmp.eq.s32.totalorder %s28, 3
      %p110 = por %p108, %p109
      %p111 = scmp.ne.s32.totalorder %s100, %s101
      %p112 = scmp.eq.s32.totalorder %s28, 0
      %p113 = por %p111, %p112
      %p114 = scmp.ne.s32.totalorder %s100, %s101
      %p115 = scmp.eq.s32.totalorder %s29, 3
      %p116 = por %p114, %p115
      %p118 = scmp.ne.s32.totalorder %s101, %s117
      %p119 = scmp.eq.s32.totalorder %s29, 0
      %p120 = por %p118, %p119
      %s121 = ssub.s32 %s31, %s38
      %p122 = scmp.eq.s32.totalorder %s121, 0
      %s124 = sadd.s32 %s123, 1
      %s125 = scalar_select %p122, %s123, %s124
      %p128 = pneg %p122
      %p129 = scmp.eq.s32.totalorder %s23, 3
      %p130 = por %p128, %p129
      %p131 = scmp.ne.s32.totalorder %s123, %s126
      %p132 = scmp.eq.s32.totalorder %s23, 0
      %p133 = por %p131, %p132
      %p134 = scmp.ne.s32.totalorder %s123, %s126
      %p135 = scmp.eq.s32.totalorder %s28, 3
      %p136 = por %p134, %p135
      %p137 = scmp.ne.s32.totalorder %s126, %s127
      %p138 = scmp.eq.s32.totalorder %s28, 0
      %p139 = por %p137, %p138
      %p140 = scmp.ne.s32.totalorder %s126, %s127
      %p141 = scmp.eq.s32.totalorder %s29, 3
      %p142 = por %p140, %p141
      %p144 = scmp.ne.s32.totalorder %s127, %s143
      %p145 = scmp.eq.s32.totalorder %s29, 0
      %p146 = por %p144, %p145
      %s147 = ssub.s32 %s31, %s38
      %p148 = scmp.eq.s32.totalorder %s147, 0
      %s150 = sadd.s32 %s149, 1
      %s151 = scalar_select %p148, %s149, %s150
      %p154 = pneg %p148
      %p155 = scmp.eq.s32.totalorder %s23, 3
      %p156 = por %p154, %p155
      %p157 = scmp.ne.s32.totalorder %s149, %s152
      %p158 = scmp.eq.s32.totalorder %s23, 0
      %p159 = por %p157, %p158
      %p160 = scmp.ne.s32.totalorder %s149, %s152
      %p161 = scmp.eq.s32.totalorder %s28, 3
      %p162 = por %p160, %p161
      %p163 = scmp.ne.s32.totalorder %s152, %s153
      %p164 = scmp.eq.s32.totalorder %s28, 0
      %p165 = por %p163, %p164
      %p166 = scmp.ne.s32.totalorder %s152, %s153
      %p167 = scmp.eq.s32.totalorder %s29, 3
      %p168 = por %p166, %p167
      %p170 = scmp.ne.s32.totalorder %s153, %s169
      %p171 = scmp.eq.s32.totalorder %s29, 0
      %p172 = por %p170, %p171
      %s173 = ssub.s32 %s30, %s42
      %p174 = scmp.eq.s32.totalorder %s173, 0
      %s176 = sadd.s32 %s175, 1
      %s177 = scalar_select %p174, %s175, %s176
      %p180 = pneg %p174
      %p181 = scmp.eq.s32.totalorder %s23, 3
      %p182 = por %p180, %p181
      %p183 = scmp.ne.s32.totalorder %s175, %s178
      %p184 = scmp.eq.s32.totalorder %s23, 0
      %p185 = por %p183, %p184
      %p186 = scmp.ne.s32.totalorder %s175, %s178
      %p187 = scmp.eq.s32.totalorder %s28, 3
      %p188 = por %p186, %p187
      %p189 = scmp.ne.s32.totalorder %s178, %s179
      %p190 = scmp.eq.s32.totalorder %s28, 0
      %p191 = por %p189, %p190
      %p192 = scmp.ne.s32.totalorder %s178, %s179
      %p193 = scmp.eq.s32.totalorder %s29, 3
      %p194 = por %p192, %p193
      %p196 = scmp.ne.s32.totalorder %s179, %s195
      %p197 = scmp.eq.s32.totalorder %s29, 0
      %p198 = por %p196, %p197
      %p199 = scmp.le.s32.totalorder 1, %s23
      %p200 = scmp.lt.s32.totalorder %s23, 5
      %p201 = pnand %p199, %p200
      %p202 = pneg %p201
      // Predicated region
      $region9: #{feed_forward.1} parent=5 // pred_check
        _
      $region10: #{feed_forward.1} parent=5 // pred_check_branch
        %204 = sbr.rel (%p201) target = $region12
      $region11: #{feed_forward.1} parent=5 // pred_region
        %s205 = ssub.s32 %s23, 1
      $region12: #{feed_forward.1} parent=5 // pred_fallthru
        _
      %p206 = scmp.lt.s32.totalorder %s23, 4
      // Predicated region
      $region13: #{feed_forward.1} parent=5 // pred_check
        %p207 = pneg %p206
      $region14: #{feed_forward.1} parent=5 // pred_check_branch
        %209 = sbr.rel (%p207) target = $region16
      $region15: #{feed_forward.1} parent=5 // pred_region
        // Predicated region
        $region17: #{feed_forward.1} parent=15 // pred_check
          %p210 = pneg %p55
        $region18: #{feed_forward.1} parent=15 // pred_check_branch
          %212 = sbr.rel (%p210) target = $region20
        $region19: #{feed_forward.1} parent=15 // pred_region
          %s213 = sand.u32 %s45, 1
          %s214 = scalar_lea.sflag [#allocation3], %s213
          %s215 = sand.u32 %s45, 1
          %s216 = smul.addr %s215, 64
          %s217 = scalar_lea.vmem [#allocation2], %s216
          %s218 = smul.u32 8, %s30
          %220 = vsyncadd %s214, 0
          %s221 = smul.addr %s218, 8
          %s222 = scalar_lea.hbm %s0, %s221
          %s223 = sshll.u32 %s222, 4
          %s224 = int_to_ptr.hbm [resolvable:$true] %s223
          %s225 = sshll.u32 %s217, 4
          %s226 = int_to_ptr.vmem [resolvable:$true] %s225
          %231 = dma.hbm_to_vmem [thread:$0]  %s224, 1024, %s226, %s214, 128, 128, 8
        $region20: #{feed_forward.1} parent=15 // pred_fallthru
          _
        // Predicated region
        $region21: #{feed_forward.1} parent=15 // pred_check
          %p232 = pneg %p81
        $region22: #{feed_forward.1} parent=15 // pred_check_branch
          %234 = sbr.rel (%p232) target = $region24
        $region23: #{feed_forward.1} parent=15 // pred_region
          %s235 = sand.u32 %s23, 1
          %s236 = scalar_lea.sflag [#allocation6], %s235
          %s237 = sand.u32 %s71, 1
          %s238 = smul.addr %s237, 128
          %s239 = scalar_lea.vmem [#allocation5], %s238
          %s240 = smul.u32 2, %s31
          %242 = vsyncadd %s236, 0
          %s243 = smul.addr %s240, 4
          %s244 = scalar_lea.hbm %s1, %s243
          %s245 = sshll.u32 %s244, 4
          %s246 = int_to_ptr.hbm [resolvable:$true] %s245
          %s247 = sshll.u32 %s239, 4
          %s248 = int_to_ptr.vmem [resolvable:$true] %s247
          %253 = dma.hbm_to_vmem [thread:$0]  %s246, 2048, %s248, %s236, 256, 128, 8
        $region24: #{feed_forward.1} parent=15 // pred_fallthru
          _
        // Predicated region
        $region25: #{feed_forward.1} parent=15 // pred_check
          %p254 = pneg %p107
        $region26: #{feed_forward.1} parent=15 // pred_check_branch
          %256 = sbr.rel (%p254) target = $region28
        $region27: #{feed_forward.1} parent=15 // pred_region
          %s257 = sand.u32 %s23, 1
          %s258 = scalar_lea.sflag [#allocation6], %s257
          %s259 = sand.u32 %s97, 1
          %s260 = smul.addr %s259, 128
          %s261 = scalar_lea.vmem [#allocation7], %s260
          %s262 = smul.u32 2, %s31
          %264 = vsyncadd %s258, 0
          %s265 = smul.addr %s262, 4
          %s266 = scalar_lea.hbm %s2, %s265
          %s267 = sshll.u32 %s266, 4
          %s268 = int_to_ptr.hbm [resolvable:$true] %s267
          %s269 = sshll.u32 %s261, 4
          %s270 = int_to_ptr.vmem [resolvable:$true] %s269
          %275 = dma.hbm_to_vmem [thread:$0]  %s268, 2048, %s270, %s258, 256, 128, 8
        $region28: #{feed_forward.1} parent=15 // pred_fallthru
          _
        // Predicated region
        $region29: #{feed_forward.1} parent=15 // pred_check
          %p276 = pneg %p133
        $region30: #{feed_forward.1} parent=15 // pred_check_branch
          %278 = sbr.rel (%p276) target = $region32
        $region31: #{feed_forward.1} parent=15 // pred_region
          %s279 = smul.u32 2, %s31
          %p280 = scmp.lt.s32.totalorder %s279, 3
          %s281 = scalar_select %p280, %s279, 3
          %s282 = scalar_lea.vmem %s3, %s281
          %s283 = smul.u32 2, %s31
        $region32: #{feed_forward.1} parent=15 // pred_fallthru
          _
        // Predicated region
        $region33: #{feed_forward.1} parent=15 // pred_check
          %p284 = pneg %p159
        $region34: #{feed_forward.1} parent=15 // pred_check_branch
          %286 = sbr.rel (%p284) target = $region36
        $region35: #{feed_forward.1} parent=15 // pred_region
          %s287 = sand.u32 %s149, 1
          %s288 = scalar_lea.sflag [#allocation9], %s287
          %s289 = sand.u32 %s149, 1
          %s290 = smul.addr %s289, 128
          %s291 = scalar_lea.vmem [#allocation8], %s290
          %s292 = smul.u32 32, %s31
          %294 = vsyncadd %s288, 0
          %s295 = smul.addr %s292, 4
          %s296 = scalar_lea.hbm %s4, %s295
          %s297 = sshll.u32 %s296, 4
          %s298 = int_to_ptr.hbm [resolvable:$true] %s297
          %s299 = sshll.u32 %s291, 4
          %s300 = int_to_ptr.vmem [resolvable:$true] %s299
          %305 = dma.hbm_to_vmem [thread:$0]  %s298, 2048, %s300, %s288, 64, 64, 4
        $region36: #{feed_forward.1} parent=15 // pred_fallthru
          _
      $region16: #{feed_forward.1} parent=5 // pred_fallthru
        _
      %p306 = scmp.le.s32.totalorder 1, %s23
      %p307 = scmp.lt.s32.totalorder %s23, 5
      %p308 = pnand %p306, %p307
      %p309 = pneg %p308
      // Predicated region
      $region37: #{feed_forward.1} parent=5 // pred_check
        _
      $region38: #{feed_forward.1} parent=5 // pred_check_branch
        %311 = sbr.rel (%p308) target = $region40
      $region39: #{feed_forward.1} parent=5 // pred_region
        %s312 = ssub.s32 %s23, 1
        %s313 = sand.u32 %s48, 1
        %s314 = scalar_lea.sflag [#allocation3], %s313
        %s315 = sand.u32 %s48, 1
        %s316 = smul.addr %s315, 64
        %s317 = scalar_lea.vmem [#allocation2], %s316
        // Predicated region
        $region41: #{feed_forward.1} parent=39 // pred_check
          %p318 = pneg %p61
        $region42: #{feed_forward.1} parent=39 // pred_check_branch
          %320 = sbr.rel (%p318) target = $region44
        $region43: #{feed_forward.1} parent=39 // pred_region
          %322 = dma.done %s314, 1024
        $region44: #{feed_forward.1} parent=39 // pred_fallthru
          _
        %s323 = sand.u32 %s28, 1
        %s324 = scalar_lea.sflag [#allocation6], %s323
        %s325 = sand.u32 %s74, 1
        %s326 = smul.addr %s325, 128
        %s327 = scalar_lea.vmem [#allocation5], %s326
        // Predicated region
        $region45: #{feed_forward.1} parent=39 // pred_check
          %p328 = pneg %p87
        $region46: #{feed_forward.1} parent=39 // pred_check_branch
          %330 = sbr.rel (%p328) target = $region48
        $region47: #{feed_forward.1} parent=39 // pred_region
          %332 = dma.done %s324, 2048
        $region48: #{feed_forward.1} parent=39 // pred_fallthru
          _
        %s333 = sand.u32 %s28, 1
        %s334 = scalar_lea.sflag [#allocation6], %s333
        %s335 = sand.u32 %s100, 1
        %s336 = smul.addr %s335, 128
        %s337 = scalar_lea.vmem [#allocation7], %s336
        // Predicated region
        $region49: #{feed_forward.1} parent=39 // pred_check
          %p338 = pneg %p113
        $region50: #{feed_forward.1} parent=39 // pred_check_branch
          %340 = sbr.rel (%p338) target = $region52
        $region51: #{feed_forward.1} parent=39 // pred_region
          %342 = dma.done %s334, 2048
        $region52: #{feed_forward.1} parent=39 // pred_fallthru
          _
        %s343 = sand.u32 %s152, 1
        %s344 = scalar_lea.sflag [#allocation9], %s343
        %s345 = sand.u32 %s152, 1
        %s346 = smul.addr %s345, 128
        %s347 = scalar_lea.vmem [#allocation8], %s346
        // Predicated region
        $region53: #{feed_forward.1} parent=39 // pred_check
          %p348 = pneg %p165
        $region54: #{feed_forward.1} parent=39 // pred_check_branch
          %350 = sbr.rel (%p348) target = $region56
        $region55: #{feed_forward.1} parent=39 // pred_region
          %352 = dma.done %s344, 2048
        $region56: #{feed_forward.1} parent=39 // pred_fallthru
          _
        %s353 = sand.u32 %s48, 1
        %s354 = scalar_lea.sflag [#allocation3], %s353
        %s355 = sand.u32 %s48, 1
        %s356 = smul.addr %s355, 64
        %s357 = scalar_lea.vmem [#allocation2], %s356
        %p358 = pneg %p61
        %p359 = pneg %p58
        %s360 = sand.u32 %s28, 1
        %s361 = scalar_lea.sflag [#allocation6], %s360
        %s362 = sand.u32 %s74, 1
        %s363 = smul.addr %s362, 128
        %s364 = scalar_lea.vmem [#allocation5], %s363
        %p365 = pneg %p87
        %p366 = pneg %p84
        %s367 = sand.u32 %s28, 1
        %s368 = scalar_lea.sflag [#allocation6], %s367
        %s369 = sand.u32 %s100, 1
        %s370 = smul.addr %s369, 128
        %s371 = scalar_lea.vmem [#allocation7], %s370
        %p372 = pneg %p113
        %p373 = pneg %p110
        %s374 = smul.u32 2, %s33
        %p375 = scmp.lt.s32.totalorder %s374, 3
        %s376 = scalar_select %p375, %s374, 3
        %s377 = scalar_lea.vmem %s3, %s376
        %p378 = pneg %p139
        %p379 = pneg %p136
        %s380 = sand.u32 %s152, 1
        %s381 = scalar_lea.sflag [#allocation9], %s380
        %s382 = sand.u32 %s152, 1
        %s383 = smul.addr %s382, 128
        %s384 = scalar_lea.vmem [#allocation8], %s383
        %p385 = pneg %p165
        %p386 = pneg %p162
        %p387 = pneg %p191
        %p388 = pneg %p188
        %s389 = sand.u32 %s178, 1
        %s390 = scalar_lea.sflag [#allocation4], %s389
        %s391 = sand.u32 %s178, 1
        %s392 = smul.addr %s391, 64
        %s393 = scalar_lea.vmem [#allocation10], %s392
        %s394 = smul.u32 8, %s32
        %s395 = smul.u32 2, %s33
        %s396 = smul.u32 2, %s33
        %s397 = smul.u32 2, %s33
        %p398 = scmp.lt.s32.totalorder %s397, 3
        %s399 = scalar_select %p398, %s397, 3
        %s400 = scalar_lea.vmem %s3, %s399
        %s401 = smul.u32 2, %s33
        %s402 = smul.u32 32, %s33
        %s403 = smul.u32 8, %s32
        %p404 = scmp.eq.s32.totalorder %s33, 0
        // Predicated region
        $region57: #{feed_forward.1} parent=39 // pred_check
          %p405 = pneg %p404
        $region58: #{feed_forward.1} parent=39 // pred_check_branch
          %407 = sbr.rel (%p405) target = $region60
        $region59: #{feed_forward.1} parent=39 // pred_region
          %408 = vst [vmem:[%s393] sm:$0xff] 0.0
          %409 = vst [vmem:[%s393 + $0x8] sm:$0xff] 0.0
          %410 = vst [vmem:[%s393 + $0x10] sm:$0xff] 0.0
          %411 = vst [vmem:[%s393 + $0x18] sm:$0xff] 0.0
          %412 = vst [vmem:[%s393 + $0x20] sm:$0xff] 0.0
          %413 = vst [vmem:[%s393 + $0x28] sm:$0xff] 0.0
          %414 = vst [vmem:[%s393 + $0x30] sm:$0xff] 0.0
          %415 = vst [vmem:[%s393 + $0x38] sm:$0xff] 0.0
        $region60: #{feed_forward.1} parent=39 // pred_fallthru
          _
        %v416 = vld [vmem:[%s393] sm:$0xff]
        %v417 = vld [vmem:[%s393 + $0x8] sm:$0xff]
        %v418 = vld [vmem:[%s393 + $0x10] sm:$0xff]
        %v419 = vld [vmem:[%s393 + $0x18] sm:$0xff]
        %v420 = vld [vmem:[%s393 + $0x20] sm:$0xff]
        %v421 = vld [vmem:[%s393 + $0x28] sm:$0xff]
        %v422 = vld [vmem:[%s393 + $0x30] sm:$0xff]
        %v423 = vld [vmem:[%s393 + $0x38] sm:$0xff]
        %v424 = vld [vmem:[%s317] sm:$0xff]
        %v425 = vld [vmem:[%s317 + $0x8] sm:$0xff]
        %v426 = vld [vmem:[%s317 + $0x10] sm:$0xff]
        %v427 = vld [vmem:[%s317 + $0x18] sm:$0xff]
        %v428 = vld [vmem:[%s317 + $0x20] sm:$0xff]
        %v429 = vld [vmem:[%s317 + $0x28] sm:$0xff]
        %v430 = vld [vmem:[%s317 + $0x30] sm:$0xff]
        %v431 = vld [vmem:[%s317 + $0x38] sm:$0xff]
        %v432 = vpack.c.bf16 %v425, %v424
        %v433 = vpack.c.bf16 %v427, %v426
        %v434 = vpack.c.bf16 %v429, %v428
        %v435 = vpack.c.bf16 %v431, %v430
        %v436 = vld [vmem:[%s327] sm:$0xff]
        %v437 = vld [vmem:[%s327 + $0x8] sm:$0xff]
        %v438 = vld [vmem:[%s327 + $0x10] sm:$0xff]
        %v439 = vld [vmem:[%s327 + $0x18] sm:$0xff]
        %v440 = vld [vmem:[%s327 + $0x20] sm:$0xff]
        %v441 = vld [vmem:[%s327 + $0x28] sm:$0xff]
        %v442 = vld [vmem:[%s327 + $0x30] sm:$0xff]
        %v443 = vld [vmem:[%s327 + $0x38] sm:$0xff]
        %v444 = vld [vmem:[%s327 + $0x40] sm:$0xff]
        %v445 = vld [vmem:[%s327 + $0x48] sm:$0xff]
        %v446 = vld [vmem:[%s327 + $0x50] sm:$0xff]
        %v447 = vld [vmem:[%s327 + $0x58] sm:$0xff]
        %v448 = vld [vmem:[%s327 + $0x60] sm:$0xff]
        %v449 = vld [vmem:[%s327 + $0x68] sm:$0xff]
        %v450 = vld [vmem:[%s327 + $0x70] sm:$0xff]
        %v451 = vld [vmem:[%s327 + $0x78] sm:$0xff]
        %v468 = vunpack.c.l.b16 %v436
        %v469 = vunpack.c.h.b16 %v436
        %v470 = vunpack.c.l.b16 %v437
        %v471 = vunpack.c.h.b16 %v437
        %v472 = vunpack.c.l.b16 %v438
        %v473 = vunpack.c.h.b16 %v438
        %v474 = vunpack.c.l.b16 %v439
        %v475 = vunpack.c.h.b16 %v439
        %v476 = vunpack.c.l.b16 %v440
        %v477 = vunpack.c.h.b16 %v440
        %v478 = vunpack.c.l.b16 %v441
        %v479 = vunpack.c.h.b16 %v441
        %v480 = vunpack.c.l.b16 %v442
        %v481 = vunpack.c.h.b16 %v442
        %v482 = vunpack.c.l.b16 %v443
        %v483 = vunpack.c.h.b16 %v443
        %v484 = vunpack.c.l.b16 %v444
        %v485 = vunpack.c.h.b16 %v444
        %v486 = vunpack.c.l.b16 %v445
        %v487 = vunpack.c.h.b16 %v445
        %v488 = vunpack.c.l.b16 %v446
        %v489 = vunpack.c.h.b16 %v446
        %v490 = vunpack.c.l.b16 %v447
        %v491 = vunpack.c.h.b16 %v447
        %v492 = vunpack.c.l.b16 %v448
        %v493 = vunpack.c.h.b16 %v448
        %v494 = vunpack.c.l.b16 %v449
        %v495 = vunpack.c.h.b16 %v449
        %v496 = vunpack.c.l.b16 %v450
        %v497 = vunpack.c.h.b16 %v450
        %v498 = vunpack.c.l.b16 %v451
        %v499 = vunpack.c.h.b16 %v451
        %v500 = vpack.c.b16 %v470, %v468
        %v501 = vpack.c.b16 %v471, %v469
        %v502 = vpack.c.b16 %v474, %v472
        %v503 = vpack.c.b16 %v475, %v473
        %v504 = vpack.c.b16 %v478, %v476
        %v505 = vpack.c.b16 %v479, %v477
        %v506 = vpack.c.b16 %v482, %v480
        %v507 = vpack.c.b16 %v483, %v481
        %v508 = vpack.c.b16 %v486, %v484
        %v509 = vpack.c.b16 %v487, %v485
        %v510 = vpack.c.b16 %v490, %v488
        %v511 = vpack.c.b16 %v491, %v489
        %v512 = vpack.c.b16 %v494, %v492
        %v513 = vpack.c.b16 %v495, %v493
        %v514 = vpack.c.b16 %v498, %v496
        %v515 = vpack.c.b16 %v499, %v497
        %532 = vmatpush.bf16.msra.mxu0 %v514
        %533 = vmatpush.bf16.msra.mxu0 %v512
        %534 = vmatpush.bf16.msra.mxu0 %v510
        %535 = vmatpush.bf16.msra.mxu0 %v508
        %536 = vmatpush.bf16.msra.mxu0 %v506
        %537 = vmatpush.bf16.msra.mxu0 %v504
        %538 = vmatpush.bf16.msra.mxu0 %v502
        %539 = vmatpush.bf16.msra.mxu0 %v500
        %540 = vmatmul.bf16.gmra.mxu0 %v432
        %v541 = vpop.f32.mrf.mxu0
        %v542 = vadd.f32 0.0, %v541
        %v543 = vpop.f32.mrf.mxu0
        %v544 = vadd.f32 0.0, %v543
        %545 = vmatmul.bf16.gmra.mxu0 %v433
        %v546 = vpop.f32.mrf.mxu0
        %v547 = vadd.f32 0.0, %v546
        %v548 = vpop.f32.mrf.mxu0
        %v549 = vadd.f32 0.0, %v548
        %550 = vmatmul.bf16.gmra.mxu0 %v434
        %v551 = vpop.f32.mrf.mxu0
        %v552 = vadd.f32 0.0, %v551
        %v553 = vpop.f32.mrf.mxu0
        %v554 = vadd.f32 0.0, %v553
        %555 = vmatmul.bf16.gmra.mxu0 %v435
        %v556 = vpop.f32.mrf.mxu0
        %v557 = vadd.f32 0.0, %v556
        %v558 = vpop.f32.mrf.mxu0
        %v559 = vadd.f32 0.0, %v558
        %560 = vdwg.mxu0
        %561 = vmatpush.bf16.msra.mxu0 %v515
        %562 = vmatpush.bf16.msra.mxu0 %v513
        %563 = vmatpush.bf16.msra.mxu0 %v511
        %564 = vmatpush.bf16.msra.mxu0 %v509
        %565 = vmatpush.bf16.msra.mxu0 %v507
        %566 = vmatpush.bf16.msra.mxu0 %v505
        %567 = vmatpush.bf16.msra.mxu0 %v503
        %568 = vmatpush.bf16.msra.mxu0 %v501
        %569 = vmatmul.bf16.gmra.mxu0 %v432
        %v570 = vpop.f32.mrf.mxu0
        %v571 = vadd.f32 0.0, %v570
        %v572 = vpop.f32.mrf.mxu0
        %v573 = vadd.f32 0.0, %v572
        %574 = vmatmul.bf16.gmra.mxu0 %v433
        %v575 = vpop.f32.mrf.mxu0
        %v576 = vadd.f32 0.0, %v575
        %v577 = vpop.f32.mrf.mxu0
        %v578 = vadd.f32 0.0, %v577
        %579 = vmatmul.bf16.gmra.mxu0 %v434
        %v580 = vpop.f32.mrf.mxu0
        %v581 = vadd.f32 0.0, %v580
        %v582 = vpop.f32.mrf.mxu0
        %v583 = vadd.f32 0.0, %v582
        %584 = vmatmul.bf16.gmra.mxu0 %v435
        %v585 = vpop.f32.mrf.mxu0
        %v586 = vadd.f32 0.0, %v585
        %v587 = vpop.f32.mrf.mxu0
        %v588 = vadd.f32 0.0, %v587
        %589 = vdwg.mxu0
        %v590 = vld [vmem:[%s337] sm:$0xff]
        %v591 = vld [vmem:[%s337 + $0x8] sm:$0xff]
        %v592 = vld [vmem:[%s337 + $0x10] sm:$0xff]
        %v593 = vld [vmem:[%s337 + $0x18] sm:$0xff]
        %v594 = vld [vmem:[%s337 + $0x20] sm:$0xff]
        %v595 = vld [vmem:[%s337 + $0x28] sm:$0xff]
        %v596 = vld [vmem:[%s337 + $0x30] sm:$0xff]
        %v597 = vld [vmem:[%s337 + $0x38] sm:$0xff]
        %v598 = vld [vmem:[%s337 + $0x40] sm:$0xff]
        %v599 = vld [vmem:[%s337 + $0x48] sm:$0xff]
        %v600 = vld [vmem:[%s337 + $0x50] sm:$0xff]
        %v601 = vld [vmem:[%s337 + $0x58] sm:$0xff]
        %v602 = vld [vmem:[%s337 + $0x60] sm:$0xff]
        %v603 = vld [vmem:[%s337 + $0x68] sm:$0xff]
        %v604 = vld [vmem:[%s337 + $0x70] sm:$0xff]
        %v605 = vld [vmem:[%s337 + $0x78] sm:$0xff]
        %v606 = vld [vmem:[%s400] sm:$0x3]
        %v608 = vperm.slane %v606, 0
        %v609 = vperm.slane %v606, 1
        %v628 = vunpack.c.l.b16 %v590
        %v629 = vunpack.c.h.b16 %v590
        %v630 = vunpack.c.l.b16 %v591
        %v631 = vunpack.c.h.b16 %v591
        %v632 = vunpack.c.l.b16 %v592
        %v633 = vunpack.c.h.b16 %v592
        %v634 = vunpack.c.l.b16 %v593
        %v635 = vunpack.c.h.b16 %v593
        %v636 = vunpack.c.l.b16 %v594
        %v637 = vunpack.c.h.b16 %v594
        %v638 = vunpack.c.l.b16 %v595
        %v639 = vunpack.c.h.b16 %v595
        %v640 = vunpack.c.l.b16 %v596
        %v641 = vunpack.c.h.b16 %v596
        %v642 = vunpack.c.l.b16 %v597
        %v643 = vunpack.c.h.b16 %v597
        %v644 = vunpack.c.l.b16 %v598
        %v645 = vunpack.c.h.b16 %v598
        %v646 = vunpack.c.l.b16 %v599
        %v647 = vunpack.c.h.b16 %v599
        %v648 = vunpack.c.l.b16 %v600
        %v649 = vunpack.c.h.b16 %v600
        %v650 = vunpack.c.l.b16 %v601
        %v651 = vunpack.c.h.b16 %v601
        %v652 = vunpack.c.l.b16 %v602
        %v653 = vunpack.c.h.b16 %v602
        %v654 = vunpack.c.l.b16 %v603
        %v655 = vunpack.c.h.b16 %v603
        %v656 = vunpack.c.l.b16 %v604
        %v657 = vunpack.c.h.b16 %v604
        %v658 = vunpack.c.l.b16 %v605
        %v659 = vunpack.c.h.b16 %v605
        %v660 = vpack.c.b16 %v630, %v628
        %v661 = vpack.c.b16 %v631, %v629
        %v662 = vpack.c.b16 %v634, %v632
        %v663 = vpack.c.b16 %v635, %v633
        %v664 = vpack.c.b16 %v638, %v636
        %v665 = vpack.c.b16 %v639, %v637
        %v666 = vpack.c.b16 %v642, %v640
        %v667 = vpack.c.b16 %v643, %v641
        %v668 = vpack.c.b16 %v646, %v644
        %v669 = vpack.c.b16 %v647, %v645
        %v670 = vpack.c.b16 %v650, %v648
        %v671 = vpack.c.b16 %v651, %v649
        %v672 = vpack.c.b16 %v654, %v652
        %v673 = vpack.c.b16 %v655, %v653
        %v674 = vpack.c.b16 %v658, %v656
        %v675 = vpack.c.b16 %v659, %v657
        %692 = vmatpush.bf16.msra.mxu0 %v674
        %693 = vmatpush.bf16.msra.mxu0 %v672
        %694 = vmatpush.bf16.msra.mxu0 %v670
        %695 = vmatpush.bf16.msra.mxu0 %v668
        %696 = vmatpush.bf16.msra.mxu0 %v666
        %697 = vmatpush.bf16.msra.mxu0 %v664
        %698 = vmatpush.bf16.msra.mxu0 %v662
        %699 = vmatpush.bf16.msra.mxu0 %v660
        %700 = vmatmul.bf16.gmra.mxu0 %v432
        %v701 = vpop.f32.mrf.mxu0
        %v702 = vadd.f32 %v608, %v701
        %v703 = vpop.f32.mrf.mxu0
        %v704 = vadd.f32 %v608, %v703
        %705 = vmatmul.bf16.gmra.mxu0 %v433
        %v706 = vpop.f32.mrf.mxu0
        %v707 = vadd.f32 %v608, %v706
        %v708 = vpop.f32.mrf.mxu0
        %v709 = vadd.f32 %v608, %v708
        %710 = vmatmul.bf16.gmra.mxu0 %v434
        %v711 = vpop.f32.mrf.mxu0
        %v712 = vadd.f32 %v608, %v711
        %v713 = vpop.f32.mrf.mxu0
        %v714 = vadd.f32 %v608, %v713
        %715 = vmatmul.bf16.gmra.mxu0 %v435
        %v716 = vpop.f32.mrf.mxu0
        %v717 = vadd.f32 %v608, %v716
        %v718 = vpop.f32.mrf.mxu0
        %v719 = vadd.f32 %v608, %v718
        %720 = vdwg.mxu0
        %721 = vmatpush.bf16.msra.mxu0 %v675
        %722 = vmatpush.bf16.msra.mxu0 %v673
        %723 = vmatpush.bf16.msra.mxu0 %v671
        %724 = vmatpush.bf16.msra.mxu0 %v669
        %725 = vmatpush.bf16.msra.mxu0 %v667
        %726 = vmatpush.bf16.msra.mxu0 %v665
        %727 = vmatpush.bf16.msra.mxu0 %v663
        %728 = vmatpush.bf16.msra.mxu0 %v661
        %729 = vmatmul.bf16.gmra.mxu0 %v432
        %v730 = vpop.f32.mrf.mxu0
        %v731 = vadd.f32 %v609, %v730
        %v732 = vpop.f32.mrf.mxu0
        %v733 = vadd.f32 %v609, %v732
        %734 = vmatmul.bf16.gmra.mxu0 %v433
        %v735 = vpop.f32.mrf.mxu0
        %v736 = vadd.f32 %v609, %v735
        %v737 = vpop.f32.mrf.mxu0
        %v738 = vadd.f32 %v609, %v737
        %739 = vmatmul.bf16.gmra.mxu0 %v434
        %v740 = vpop.f32.mrf.mxu0
        %v741 = vadd.f32 %v609, %v740
        %v742 = vpop.f32.mrf.mxu0
        %v743 = vadd.f32 %v609, %v742
        %744 = vmatmul.bf16.gmra.mxu0 %v435
        %v745 = vpop.f32.mrf.mxu0
        %v746 = vadd.f32 %v609, %v745
        %v747 = vpop.f32.mrf.mxu0
        %v748 = vadd.f32 %v609, %v747
        %749 = vdwg.mxu0
        %v750 = vxor.u32 %v542, 2147483648
        %v751 = vxor.u32 %v571, 2147483648
        %v752 = vxor.u32 %v544, 2147483648
        %v753 = vxor.u32 %v573, 2147483648
        %v754 = vxor.u32 %v547, 2147483648
        %v755 = vxor.u32 %v576, 2147483648
        %v756 = vxor.u32 %v549, 2147483648
        %v757 = vxor.u32 %v578, 2147483648
        %v758 = vxor.u32 %v552, 2147483648
        %v759 = vxor.u32 %v581, 2147483648
        %v760 = vxor.u32 %v554, 2147483648
        %v761 = vxor.u32 %v583, 2147483648
        %v762 = vxor.u32 %v557, 2147483648
        %v763 = vxor.u32 %v586, 2147483648
        %v764 = vxor.u32 %v559, 2147483648
        %v765 = vxor.u32 %v588, 2147483648
        %v766 = vmul.f32 %v750, 1.442695
        %v767 = vpow.pop %v766
        %v768 = vmul.f32 %v751, 1.442695
        %v769 = vpow.pop %v768
        %v770 = vmul.f32 %v752, 1.442695
        %v771 = vpow.pop %v770
        %v772 = vmul.f32 %v753, 1.442695
        %v773 = vpow.pop %v772
        %v774 = vmul.f32 %v754, 1.442695
        %v775 = vpow.pop %v774
        %v776 = vmul.f32 %v755, 1.442695
        %v777 = vpow.pop %v776
        %v778 = vmul.f32 %v756, 1.442695
        %v779 = vpow.pop %v778
        %v780 = vmul.f32 %v757, 1.442695
        %v781 = vpow.pop %v780
        %v782 = vmul.f32 %v758, 1.442695
        %v783 = vpow.pop %v782
        %v784 = vmul.f32 %v759, 1.442695
        %v785 = vpow.pop %v784
        %v786 = vmul.f32 %v760, 1.442695
        %v787 = vpow.pop %v786
        %v788 = vmul.f32 %v761, 1.442695
        %v789 = vpow.pop %v788
        %v790 = vmul.f32 %v762, 1.442695
        %v791 = vpow.pop %v790
        %v792 = vmul.f32 %v763, 1.442695
        %v793 = vpow.pop %v792
        %v794 = vmul.f32 %v764, 1.442695
        %v795 = vpow.pop %v794
        %v796 = vmul.f32 %v765, 1.442695
        %v797 = vpow.pop %v796
        %v798 = vadd.f32 %v767, 1.0
        %v799 = vadd.f32 %v769, 1.0
        %v800 = vadd.f32 %v771, 1.0
        %v801 = vadd.f32 %v773, 1.0
        %v802 = vadd.f32 %v775, 1.0
        %v803 = vadd.f32 %v777, 1.0
        %v804 = vadd.f32 %v779, 1.0
        %v805 = vadd.f32 %v781, 1.0
        %v806 = vadd.f32 %v783, 1.0
        %v807 = vadd.f32 %v785, 1.0
        %v808 = vadd.f32 %v787, 1.0
        %v809 = vadd.f32 %v789, 1.0
        %v810 = vadd.f32 %v791, 1.0
        %v811 = vadd.f32 %v793, 1.0
        %v812 = vadd.f32 %v795, 1.0
        %v813 = vadd.f32 %v797, 1.0
        %v814 = vrcp.pop %v798
        %v815 = vmul.f32 %v798, %v814
        %v816 = vsub.f32 1.0, %v815
        %v817 = vmul.f32 %v814, %v816
        %v818 = vadd.f32 %v814, %v817
        %vm819 = vweird.f32 %v798
        %vm820 = vweird.f32 %v814
        %vm821 = vmor %vm819, %vm820
        %v822 = vsel %vm821, %v814, %v818
        %v823 = vand.u32 2147483647, %v798
        %vm824 = vcmp.eq.f32.partialorder %v823, 8.507059e+37
        %v825 = vand.u32 %v798, 2147483648
        %v826 = vor.u32 1.1754944e-38, %v825
        %v827 = vsel %vm824, %v826, %v822
        %v828 = vmul.f32 1.0, %v827
        %v829 = vrcp.pop %v799
        %v830 = vmul.f32 %v799, %v829
        %v831 = vsub.f32 1.0, %v830
        %v832 = vmul.f32 %v829, %v831
        %v833 = vadd.f32 %v829, %v832
        %vm834 = vweird.f32 %v799
        %vm835 = vweird.f32 %v829
        %vm836 = vmor %vm834, %vm835
        %v837 = vsel %vm836, %v829, %v833
        %v838 = vand.u32 2147483647, %v799
        %vm839 = vcmp.eq.f32.partialorder %v838, 8.507059e+37
        %v840 = vand.u32 %v799, 2147483648
        %v841 = vor.u32 1.1754944e-38, %v840
        %v842 = vsel %vm839, %v841, %v837
        %v843 = vmul.f32 1.0, %v842
        %v844 = vrcp.pop %v800
        %v845 = vmul.f32 %v800, %v844
        %v846 = vsub.f32 1.0, %v845
        %v847 = vmul.f32 %v844, %v846
        %v848 = vadd.f32 %v844, %v847
        %vm849 = vweird.f32 %v800
        %vm850 = vweird.f32 %v844
        %vm851 = vmor %vm849, %vm850
        %v852 = vsel %vm851, %v844, %v848
        %v853 = vand.u32 2147483647, %v800
        %vm854 = vcmp.eq.f32.partialorder %v853, 8.507059e+37
        %v855 = vand.u32 %v800, 2147483648
        %v856 = vor.u32 1.1754944e-38, %v855
        %v857 = vsel %vm854, %v856, %v852
        %v858 = vmul.f32 1.0, %v857
        %v859 = vrcp.pop %v801
        %v860 = vmul.f32 %v801, %v859
        %v861 = vsub.f32 1.0, %v860
        %v862 = vmul.f32 %v859, %v861
        %v863 = vadd.f32 %v859, %v862
        %vm864 = vweird.f32 %v801
        %vm865 = vweird.f32 %v859
        %vm866 = vmor %vm864, %vm865
        %v867 = vsel %vm866, %v859, %v863
        %v868 = vand.u32 2147483647, %v801
        %vm869 = vcmp.eq.f32.partialorder %v868, 8.507059e+37
        %v870 = vand.u32 %v801, 2147483648
        %v871 = vor.u32 1.1754944e-38, %v870
        %v872 = vsel %vm869, %v871, %v867
        %v873 = vmul.f32 1.0, %v872
        %v874 = vrcp.pop %v802
        %v875 = vmul.f32 %v802, %v874
        %v876 = vsub.f32 1.0, %v875
        %v877 = vmul.f32 %v874, %v876
        %v878 = vadd.f32 %v874, %v877
        %vm879 = vweird.f32 %v802
        %vm880 = vweird.f32 %v874
        %vm881 = vmor %vm879, %vm880
        %v882 = vsel %vm881, %v874, %v878
        %v883 = vand.u32 2147483647, %v802
        %vm884 = vcmp.eq.f32.partialorder %v883, 8.507059e+37
        %v885 = vand.u32 %v802, 2147483648
        %v886 = vor.u32 1.1754944e-38, %v885
        %v887 = vsel %vm884, %v886, %v882
        %v888 = vmul.f32 1.0, %v887
        %v889 = vrcp.pop %v803
        %v890 = vmul.f32 %v803, %v889
        %v891 = vsub.f32 1.0, %v890
        %v892 = vmul.f32 %v889, %v891
        %v893 = vadd.f32 %v889, %v892
        %vm894 = vweird.f32 %v803
        %vm895 = vweird.f32 %v889
        %vm896 = vmor %vm894, %vm895
        %v897 = vsel %vm896, %v889, %v893
        %v898 = vand.u32 2147483647, %v803
        %vm899 = vcmp.eq.f32.partialorder %v898, 8.507059e+37
        %v900 = vand.u32 %v803, 2147483648
        %v901 = vor.u32 1.1754944e-38, %v900
        %v902 = vsel %vm899, %v901, %v897
        %v903 = vmul.f32 1.0, %v902
        %v904 = vrcp.pop %v804
        %v905 = vmul.f32 %v804, %v904
        %v906 = vsub.f32 1.0, %v905
        %v907 = vmul.f32 %v904, %v906
        %v908 = vadd.f32 %v904, %v907
        %vm909 = vweird.f32 %v804
        %vm910 = vweird.f32 %v904
        %vm911 = vmor %vm909, %vm910
        %v912 = vsel %vm911, %v904, %v908
        %v913 = vand.u32 2147483647, %v804
        %vm914 = vcmp.eq.f32.partialorder %v913, 8.507059e+37
        %v915 = vand.u32 %v804, 2147483648
        %v916 = vor.u32 1.1754944e-38, %v915
        %v917 = vsel %vm914, %v916, %v912
        %v918 = vmul.f32 1.0, %v917
        %v919 = vrcp.pop %v805
        %v920 = vmul.f32 %v805, %v919
        %v921 = vsub.f32 1.0, %v920
        %v922 = vmul.f32 %v919, %v921
        %v923 = vadd.f32 %v919, %v922
        %vm924 = vweird.f32 %v805
        %vm925 = vweird.f32 %v919
        %vm926 = vmor %vm924, %vm925
        %v927 = vsel %vm926, %v919, %v923
        %v928 = vand.u32 2147483647, %v805
        %vm929 = vcmp.eq.f32.partialorder %v928, 8.507059e+37
        %v930 = vand.u32 %v805, 2147483648
        %v931 = vor.u32 1.1754944e-38, %v930
        %v932 = vsel %vm929, %v931, %v927
        %v933 = vmul.f32 1.0, %v932
        %v934 = vrcp.pop %v806
        %v935 = vmul.f32 %v806, %v934
        %v936 = vsub.f32 1.0, %v935
        %v937 = vmul.f32 %v934, %v936
        %v938 = vadd.f32 %v934, %v937
        %vm939 = vweird.f32 %v806
        %vm940 = vweird.f32 %v934
        %vm941 = vmor %vm939, %vm940
        %v942 = vsel %vm941, %v934, %v938
        %v943 = vand.u32 2147483647, %v806
        %vm944 = vcmp.eq.f32.partialorder %v943, 8.507059e+37
        %v945 = vand.u32 %v806, 2147483648
        %v946 = vor.u32 1.1754944e-38, %v945
        %v947 = vsel %vm944, %v946, %v942
        %v948 = vmul.f32 1.0, %v947
        %v949 = vrcp.pop %v807
        %v950 = vmul.f32 %v807, %v949
        %v951 = vsub.f32 1.0, %v950
        %v952 = vmul.f32 %v949, %v951
        %v953 = vadd.f32 %v949, %v952
        %vm954 = vweird.f32 %v807
        %vm955 = vweird.f32 %v949
        %vm956 = vmor %vm954, %vm955
        %v957 = vsel %vm956, %v949, %v953
        %v958 = vand.u32 2147483647, %v807
        %vm959 = vcmp.eq.f32.partialorder %v958, 8.507059e+37
        %v960 = vand.u32 %v807, 2147483648
        %v961 = vor.u32 1.1754944e-38, %v960
        %v962 = vsel %vm959, %v961, %v957
        %v963 = vmul.f32 1.0, %v962
        %v964 = vrcp.pop %v808
        %v965 = vmul.f32 %v808, %v964
        %v966 = vsub.f32 1.0, %v965
        %v967 = vmul.f32 %v964, %v966
        %v968 = vadd.f32 %v964, %v967
        %vm969 = vweird.f32 %v808
        %vm970 = vweird.f32 %v964
        %vm971 = vmor %vm969, %vm970
        %v972 = vsel %vm971, %v964, %v968
        %v973 = vand.u32 2147483647, %v808
        %vm974 = vcmp.eq.f32.partialorder %v973, 8.507059e+37
        %v975 = vand.u32 %v808, 2147483648
        %v976 = vor.u32 1.1754944e-38, %v975
        %v977 = vsel %vm974, %v976, %v972
        %v978 = vmul.f32 1.0, %v977
        %v979 = vrcp.pop %v809
        %v980 = vmul.f32 %v809, %v979
        %v981 = vsub.f32 1.0, %v980
        %v982 = vmul.f32 %v979, %v981
        %v983 = vadd.f32 %v979, %v982
        %vm984 = vweird.f32 %v809
        %vm985 = vweird.f32 %v979
        %vm986 = vmor %vm984, %vm985
        %v987 = vsel %vm986, %v979, %v983
        %v988 = vand.u32 2147483647, %v809
        %vm989 = vcmp.eq.f32.partialorder %v988, 8.507059e+37
        %v990 = vand.u32 %v809, 2147483648
        %v991 = vor.u32 1.1754944e-38, %v990
        %v992 = vsel %vm989, %v991, %v987
        %v993 = vmul.f32 1.0, %v992
        %v994 = vrcp.pop %v810
        %v995 = vmul.f32 %v810, %v994
        %v996 = vsub.f32 1.0, %v995
        %v997 = vmul.f32 %v994, %v996
        %v998 = vadd.f32 %v994, %v997
        %vm999 = vweird.f32 %v810
        %vm1000 = vweird.f32 %v994
        %vm1001 = vmor %vm999, %vm1000
        %v1002 = vsel %vm1001, %v994, %v998
        %v1003 = vand.u32 2147483647, %v810
        %vm1004 = vcmp.eq.f32.partialorder %v1003, 8.507059e+37
        %v1005 = vand.u32 %v810, 2147483648
        %v1006 = vor.u32 1.1754944e-38, %v1005
        %v1007 = vsel %vm1004, %v1006, %v1002
        %v1008 = vmul.f32 1.0, %v1007
        %v1009 = vrcp.pop %v811
        %v1010 = vmul.f32 %v811, %v1009
        %v1011 = vsub.f32 1.0, %v1010
        %v1012 = vmul.f32 %v1009, %v1011
        %v1013 = vadd.f32 %v1009, %v1012
        %vm1014 = vweird.f32 %v811
        %vm1015 = vweird.f32 %v1009
        %vm1016 = vmor %vm1014, %vm1015
        %v1017 = vsel %vm1016, %v1009, %v1013
        %v1018 = vand.u32 2147483647, %v811
        %vm1019 = vcmp.eq.f32.partialorder %v1018, 8.507059e+37
        %v1020 = vand.u32 %v811, 2147483648
        %v1021 = vor.u32 1.1754944e-38, %v1020
        %v1022 = vsel %vm1019, %v1021, %v1017
        %v1023 = vmul.f32 1.0, %v1022
        %v1024 = vrcp.pop %v812
        %v1025 = vmul.f32 %v812, %v1024
        %v1026 = vsub.f32 1.0, %v1025
        %v1027 = vmul.f32 %v1024, %v1026
        %v1028 = vadd.f32 %v1024, %v1027
        %vm1029 = vweird.f32 %v812
        %vm1030 = vweird.f32 %v1024
        %vm1031 = vmor %vm1029, %vm1030
        %v1032 = vsel %vm1031, %v1024, %v1028
        %v1033 = vand.u32 2147483647, %v812
        %vm1034 = vcmp.eq.f32.partialorder %v1033, 8.507059e+37
        %v1035 = vand.u32 %v812, 2147483648
        %v1036 = vor.u32 1.1754944e-38, %v1035
        %v1037 = vsel %vm1034, %v1036, %v1032
        %v1038 = vmul.f32 1.0, %v1037
        %v1039 = vrcp.pop %v813
        %v1040 = vmul.f32 %v813, %v1039
        %v1041 = vsub.f32 1.0, %v1040
        %v1042 = vmul.f32 %v1039, %v1041
        %v1043 = vadd.f32 %v1039, %v1042
        %vm1044 = vweird.f32 %v813
        %vm1045 = vweird.f32 %v1039
        %vm1046 = vmor %vm1044, %vm1045
        %v1047 = vsel %vm1046, %v1039, %v1043
        %v1048 = vand.u32 2147483647, %v813
        %vm1049 = vcmp.eq.f32.partialorder %v1048, 8.507059e+37
        %v1050 = vand.u32 %v813, 2147483648
        %v1051 = vor.u32 1.1754944e-38, %v1050
        %v1052 = vsel %vm1049, %v1051, %v1047
        %v1053 = vmul.f32 1.0, %v1052
        %v1054 = vmul.f32 %v542, %v828
        %v1055 = vmul.f32 %v571, %v843
        %v1056 = vmul.f32 %v544, %v858
        %v1057 = vmul.f32 %v573, %v873
        %v1058 = vmul.f32 %v547, %v888
        %v1059 = vmul.f32 %v576, %v903
        %v1060 = vmul.f32 %v549, %v918
        %v1061 = vmul.f32 %v578, %v933
        %v1062 = vmul.f32 %v552, %v948
        %v1063 = vmul.f32 %v581, %v963
        %v1064 = vmul.f32 %v554, %v978
        %v1065 = vmul.f32 %v583, %v993
        %v1066 = vmul.f32 %v557, %v1008
        %v1067 = vmul.f32 %v586, %v1023
        %v1068 = vmul.f32 %v559, %v1038
        %v1069 = vmul.f32 %v588, %v1053
        %v1070 = vmul.f32 %v1054, %v702
        %v1071 = vmul.f32 %v1055, %v731
        %v1072 = vmul.f32 %v1056, %v704
        %v1073 = vmul.f32 %v1057, %v733
        %v1074 = vmul.f32 %v1058, %v707
        %v1075 = vmul.f32 %v1059, %v736
        %v1076 = vmul.f32 %v1060, %v709
        %v1077 = vmul.f32 %v1061, %v738
        %v1078 = vmul.f32 %v1062, %v712
        %v1079 = vmul.f32 %v1063, %v741
        %v1080 = vmul.f32 %v1064, %v714
        %v1081 = vmul.f32 %v1065, %v743
        %v1082 = vmul.f32 %v1066, %v717
        %v1083 = vmul.f32 %v1067, %v746
        %v1084 = vmul.f32 %v1068, %v719
        %v1085 = vmul.f32 %v1069, %v748
        %v1086 = vpack.c.bf16 %v1072, %v1070
        %v1087 = vpack.c.bf16 %v1073, %v1071
        %v1088 = vpack.c.bf16 %v1076, %v1074
        %v1089 = vpack.c.bf16 %v1077, %v1075
        %v1090 = vpack.c.bf16 %v1080, %v1078
        %v1091 = vpack.c.bf16 %v1081, %v1079
        %v1092 = vpack.c.bf16 %v1084, %v1082
        %v1093 = vpack.c.bf16 %v1085, %v1083
        %v1094 = vld [vmem:[%s347] sm:$0xf]
        %v1095 = vld [vmem:[%s347 + $0x4] sm:$0xf]
        %v1096 = vld [vmem:[%s347 + $0x8] sm:$0xf]
        %v1097 = vld [vmem:[%s347 + $0xc] sm:$0xf]
        %v1098 = vld [vmem:[%s347 + $0x10] sm:$0xf]
        %v1099 = vld [vmem:[%s347 + $0x14] sm:$0xf]
        %v1100 = vld [vmem:[%s347 + $0x18] sm:$0xf]
        %v1101 = vld [vmem:[%s347 + $0x1c] sm:$0xf]
        %v1102 = vld [vmem:[%s347 + $0x20] sm:$0xf]
        %v1103 = vld [vmem:[%s347 + $0x24] sm:$0xf]
        %v1104 = vld [vmem:[%s347 + $0x28] sm:$0xf]
        %v1105 = vld [vmem:[%s347 + $0x2c] sm:$0xf]
        %v1106 = vld [vmem:[%s347 + $0x30] sm:$0xf]
        %v1107 = vld [vmem:[%s347 + $0x34] sm:$0xf]
        %v1108 = vld [vmem:[%s347 + $0x38] sm:$0xf]
        %v1109 = vld [vmem:[%s347 + $0x3c] sm:$0xf]
        %v1110 = vld [vmem:[%s347 + $0x40] sm:$0xf]
        %v1111 = vld [vmem:[%s347 + $0x44] sm:$0xf]
        %v1112 = vld [vmem:[%s347 + $0x48] sm:$0xf]
        %v1113 = vld [vmem:[%s347 + $0x4c] sm:$0xf]
        %v1114 = vld [vmem:[%s347 + $0x50] sm:$0xf]
        %v1115 = vld [vmem:[%s347 + $0x54] sm:$0xf]
        %v1116 = vld [vmem:[%s347 + $0x58] sm:$0xf]
        %v1117 = vld [vmem:[%s347 + $0x5c] sm:$0xf]
        %v1118 = vld [vmem:[%s347 + $0x60] sm:$0xf]
        %v1119 = vld [vmem:[%s347 + $0x64] sm:$0xf]
        %v1120 = vld [vmem:[%s347 + $0x68] sm:$0xf]
        %v1121 = vld [vmem:[%s347 + $0x6c] sm:$0xf]
        %v1122 = vld [vmem:[%s347 + $0x70] sm:$0xf]
        %v1123 = vld [vmem:[%s347 + $0x74] sm:$0xf]
        %v1124 = vld [vmem:[%s347 + $0x78] sm:$0xf]
        %v1125 = vld [vmem:[%s347 + $0x7c] sm:$0xf]
        %v1158 = vunpack.c.l.b16 %v1094
        %v1159 = vunpack.c.l.b16 %v1095
        %v1160 = vunpack.c.l.b16 %v1096
        %v1161 = vunpack.c.l.b16 %v1097
        %v1162 = vunpack.c.l.b16 %v1098
        %v1163 = vunpack.c.l.b16 %v1099
        %v1164 = vunpack.c.l.b16 %v1100
        %v1165 = vunpack.c.l.b16 %v1101
        %v1166 = vunpack.c.l.b16 %v1102
        %v1167 = vunpack.c.l.b16 %v1103
        %v1168 = vunpack.c.l.b16 %v1104
        %v1169 = vunpack.c.l.b16 %v1105
        %v1170 = vunpack.c.l.b16 %v1106
        %v1171 = vunpack.c.l.b16 %v1107
        %v1172 = vunpack.c.l.b16 %v1108
        %v1173 = vunpack.c.l.b16 %v1109
        %v1174 = vunpack.c.l.b16 %v1110
        %v1175 = vunpack.c.l.b16 %v1111
        %v1176 = vunpack.c.l.b16 %v1112
        %v1177 = vunpack.c.l.b16 %v1113
        %v1178 = vunpack.c.l.b16 %v1114
        %v1179 = vunpack.c.l.b16 %v1115
        %v1180 = vunpack.c.l.b16 %v1116
        %v1181 = vunpack.c.l.b16 %v1117
        %v1182 = vunpack.c.l.b16 %v1118
        %v1183 = vunpack.c.l.b16 %v1119
        %v1184 = vunpack.c.l.b16 %v1120
        %v1185 = vunpack.c.l.b16 %v1121
        %v1186 = vunpack.c.l.b16 %v1122
        %v1187 = vunpack.c.l.b16 %v1123
        %v1188 = vunpack.c.l.b16 %v1124
        %v1189 = vunpack.c.l.b16 %v1125
        %v1190 = vpack.c.b16 %v1159, %v1158
        %v1191 = vpack.c.b16 %v1161, %v1160
        %v1192 = vpack.c.b16 %v1163, %v1162
        %v1193 = vpack.c.b16 %v1165, %v1164
        %v1194 = vpack.c.b16 %v1167, %v1166
        %v1195 = vpack.c.b16 %v1169, %v1168
        %v1196 = vpack.c.b16 %v1171, %v1170
        %v1197 = vpack.c.b16 %v1173, %v1172
        %v1198 = vpack.c.b16 %v1175, %v1174
        %v1199 = vpack.c.b16 %v1177, %v1176
        %v1200 = vpack.c.b16 %v1179, %v1178
        %v1201 = vpack.c.b16 %v1181, %v1180
        %v1202 = vpack.c.b16 %v1183, %v1182
        %v1203 = vpack.c.b16 %v1185, %v1184
        %v1204 = vpack.c.b16 %v1187, %v1186
        %v1205 = vpack.c.b16 %v1189, %v1188
        %1222 = vmatpush.bf16.msra.mxu0 %v1197
        %1223 = vmatpush.bf16.msra.mxu0 %v1196
        %1224 = vmatpush.bf16.msra.mxu0 %v1195
        %1225 = vmatpush.bf16.msra.mxu0 %v1194
        %1226 = vmatpush.bf16.msra.mxu0 %v1193
        %1227 = vmatpush.bf16.msra.mxu0 %v1192
        %1228 = vmatpush.bf16.msra.mxu0 %v1191
        %1229 = vmatpush.bf16.msra.mxu0 %v1190
        %1230 = vmatmul.bf16.gmra.mxu0 %v1086
        %v1231 = vpop.f32.mrf.mxu0
        %v1232 = vadd.f32 0.0, %v1231
        %v1233 = vpop.f32.mrf.mxu0
        %v1234 = vadd.f32 0.0, %v1233
        %1235 = vmatmul.bf16.gmra.mxu0 %v1088
        %v1236 = vpop.f32.mrf.mxu0
        %v1237 = vadd.f32 0.0, %v1236
        %v1238 = vpop.f32.mrf.mxu0
        %v1239 = vadd.f32 0.0, %v1238
        %1240 = vmatmul.bf16.gmra.mxu0 %v1090
        %v1241 = vpop.f32.mrf.mxu0
        %v1242 = vadd.f32 0.0, %v1241
        %v1243 = vpop.f32.mrf.mxu0
        %v1244 = vadd.f32 0.0, %v1243
        %1245 = vmatmul.bf16.gmra.mxu0 %v1092
        %v1246 = vpop.f32.mrf.mxu0
        %v1247 = vadd.f32 0.0, %v1246
        %v1248 = vpop.f32.mrf.mxu0
        %v1249 = vadd.f32 0.0, %v1248
        %1250 = vdwg.mxu0
        %1251 = vmatpush.bf16.msra.mxu0 %v1205
        %1252 = vmatpush.bf16.msra.mxu0 %v1204
        %1253 = vmatpush.bf16.msra.mxu0 %v1203
        %1254 = vmatpush.bf16.msra.mxu0 %v1202
        %1255 = vmatpush.bf16.msra.mxu0 %v1201
        %1256 = vmatpush.bf16.msra.mxu0 %v1200
        %1257 = vmatpush.bf16.msra.mxu0 %v1199
        %1258 = vmatpush.bf16.msra.mxu0 %v1198
        %1259 = vmatmul.bf16.gmra.mxu0 %v1087
        %v1260 = vpop.f32.mrf.mxu0
        %v1261 = vadd.f32 %v1232, %v1260
        %v1262 = vpop.f32.mrf.mxu0
        %v1263 = vadd.f32 %v1234, %v1262
        %1264 = vmatmul.bf16.gmra.mxu0 %v1089
        %v1265 = vpop.f32.mrf.mxu0
        %v1266 = vadd.f32 %v1237, %v1265
        %v1267 = vpop.f32.mrf.mxu0
        %v1268 = vadd.f32 %v1239, %v1267
        %1269 = vmatmul.bf16.gmra.mxu0 %v1091
        %v1270 = vpop.f32.mrf.mxu0
        %v1271 = vadd.f32 %v1242, %v1270
        %v1272 = vpop.f32.mrf.mxu0
        %v1273 = vadd.f32 %v1244, %v1272
        %1274 = vmatmul.bf16.gmra.mxu0 %v1093
        %v1275 = vpop.f32.mrf.mxu0
        %v1276 = vadd.f32 %v1247, %v1275
        %v1277 = vpop.f32.mrf.mxu0
        %v1278 = vadd.f32 %v1249, %v1277
        %1279 = vdwg.mxu0
        %v1280 = vadd.f32 %v416, %v1261
        %v1281 = vadd.f32 %v417, %v1263
        %v1282 = vadd.f32 %v418, %v1266
        %v1283 = vadd.f32 %v419, %v1268
        %v1284 = vadd.f32 %v420, %v1271
        %v1285 = vadd.f32 %v421, %v1273
        %v1286 = vadd.f32 %v422, %v1276
        %v1287 = vadd.f32 %v423, %v1278
        %1288 = vst [vmem:[%s393] sm:$0xff] %v1280
        %1289 = vst [vmem:[%s393 + $0x8] sm:$0xff] %v1281
        %1290 = vst [vmem:[%s393 + $0x10] sm:$0xff] %v1282
        %1291 = vst [vmem:[%s393 + $0x18] sm:$0xff] %v1283
        %1292 = vst [vmem:[%s393 + $0x20] sm:$0xff] %v1284
        %1293 = vst [vmem:[%s393 + $0x28] sm:$0xff] %v1285
        %1294 = vst [vmem:[%s393 + $0x30] sm:$0xff] %v1286
        %1295 = vst [vmem:[%s393 + $0x38] sm:$0xff] %v1287
        %s1296 = sand.u32 %s178, 1
        %s1297 = scalar_lea.sflag [#allocation4], %s1296
        %s1298 = sand.u32 %s178, 1
        %s1299 = smul.addr %s1298, 64
        %s1300 = scalar_lea.vmem [#allocation10], %s1299
        // Predicated region
        $region61: #{feed_forward.1} parent=39 // pred_check
          %p1301 = pneg %p188
        $region62: #{feed_forward.1} parent=39 // pred_check_branch
          %1303 = sbr.rel (%p1301) target = $region64
        $region63: #{feed_forward.1} parent=39 // pred_region
          %s1304 = smul.u32 8, %s32
          %1306 = vsyncadd %s1297, 0
          %s1307 = smul.addr %s1304, 8
          %s1308 = scalar_lea.hbm %s5, %s1307
          %s1309 = sshll.u32 %s1300, 4
          %s1310 = int_to_ptr.vmem [resolvable:$true] %s1309
          %s1311 = sshll.u32 %s1308, 4
          %s1312 = int_to_ptr.hbm [resolvable:$true] %s1311
          %1317 = dma.vmem_to_hbm [thread:$0]  %s1310, 1024, %s1312, %s1297, 128, 128, 8
        $region64: #{feed_forward.1} parent=39 // pred_fallthru
          _
      $region40: #{feed_forward.1} parent=5 // pred_fallthru
        _
      %p1318 = scmp.le.s32.totalorder 2, %s23
      // Predicated region
      $region65: #{feed_forward.1} parent=5 // pred_check
        %p1319 = pneg %p1318
      $region66: #{feed_forward.1} parent=5 // pred_check_branch
        %1321 = sbr.rel (%p1319) target = $region68
      $region67: #{feed_forward.1} parent=5 // pred_region
        %s1322 = ssub.s32 %s23, 2
        // Predicated region
        $region69: #{feed_forward.1} parent=67 // pred_check
          %p1323 = pneg %p194
        $region70: #{feed_forward.1} parent=67 // pred_check_branch
          %1325 = sbr.rel (%p1323) target = $region72
        $region71: #{feed_forward.1} parent=67 // pred_region
          %s1326 = sand.u32 %s179, 1
          %s1327 = scalar_lea.sflag [#allocation4], %s1326
          %s1328 = sand.u32 %s179, 1
          %s1329 = smul.addr %s1328, 64
          %s1330 = scalar_lea.vmem [#allocation10], %s1329
          %1332 = dma.done %s1327, 1024
        $region72: #{feed_forward.1} parent=67 // pred_fallthru
          _
      $region68: #{feed_forward.1} parent=5 // pred_fallthru
        _
    $region6: #{feed_forward.1} parent=1 // loop_footer
      %s27 = sadd.s32 1, %s23
    $region7: #{feed_forward.1} parent=1 // loop_footer_branch
      %22 = sbr.rel target = $region3
    $region8: #{feed_forward.1} parent=1 // loop_exit
      _
    %1333 = vsyncpa [#allocation3], 1
    %s1334 = scalar_lea.sflag [#allocation3], 1
    %1335 = vsyncpa %s1334, 1
    %1336 = vsyncpa [#allocation6], 1
    %s1337 = scalar_lea.sflag [#allocation6], 1
    %1338 = vsyncpa %s1337, 1
    %1339 = vsyncpa [#allocation9], 1
    %s1340 = scalar_lea.sflag [#allocation9], 1
    %1341 = vsyncpa %s1340, 1
    %1342 = vsyncpa [#allocation4], 1
    %s1343 = scalar_lea.sflag [#allocation4], 1
    %1344 = vsyncpa %s1343, 1

</llo_original>
